<compile_context>
chip_gen: v7x
topology: tpu7x:2x2x1
jax: 0.10.0
libtpu: 0.0.40
codegen_flags: <defaults>
</compile_context>

<pallas_src>
import jax
import jax.numpy as jnp
from jax.experimental import pallas as pl
from jax.experimental.pallas import tpu as pltpu

_LANES = 128


def _masmm_kernel(x_ref, y_ref, z_ref, o_ref):
    # Fused elementwise hot path: (x + y) - (y * z), one pass over the VMEM tile.
    x = x_ref[...]
    y = y_ref[...]
    z = z_ref[...]
    o_ref[...] = (x + y) - (y * z)


def _round_up(a, m):
    return ((a + m - 1) // m) * m


def _sublane_multiple(dtype) -> int:
    # Native minimum sublane tile: 8 for 4-byte, 16 for 2-byte, 32 for 1-byte dtypes.
    itemsize = jnp.dtype(dtype).itemsize
    return max(8, 32 // itemsize)


def masmm(
    x,
    y,
    z,
    *,
    target_block_bytes=1 << 20,   # ~1 MiB per array per grid step
    small_bypass_elems=256 * 1024,
    force_pallas=False,
):
    """Compute (x + y) - (y * z) with a Pallas TPU kernel.

    x, y, z must share shape and dtype (matching the PyTorch broadcasting-free
    use case).
    """
    assert x.shape == y.shape == z.shape
    assert x.dtype == y.dtype == z.dtype

    orig_shape = x.shape
    dtype = x.dtype
    n = x.size
    itemsize = jnp.dtype(dtype).itemsize

    if n == 0:
        return jnp.zeros(orig_shape, dtype)

    # Small-input bypass: pallas_call launch + per-step overhead swamps tiny
    # tensors; plain XLA fusion is strictly faster there.
    if not force_pallas and n < small_bypass_elems:
        return (x + y) - (y * z)

    sublane = _sublane_multiple(dtype)

    # Flatten to a lane-dense (rows, 128) slab.
    rows = pl.cdiv(n, _LANES)
    n_lane_padded = rows * _LANES
    needs_pad = n_lane_padded != n

    # Dtype-aware block size: ~target_block_bytes per array, sublane-aligned.
    target_rows = _round_up(
        max(sublane, target_block_bytes // (_LANES * itemsize)), sublane
    )
    if rows <= target_rows:
        # Single block spanning the whole (rows, 128) slab (full-dim block is
        # always a legal block shape, even if rows isn't a sublane multiple).
        tile_rows = rows
    else:
        # Multi-block: sublane-aligned tile; cdiv grid masks the final partial
        # block, so no wrapper-side padding of the row dimension is needed.
        tile_rows = target_rows

    def flat(a):
        a = a.reshape(-1)
        if needs_pad:
            # Only the lane-remainder tail is padded (rare, ragged sizes).
            a = jnp.pad(a, (0, n_lane_padded - n))
        return a.reshape(rows, _LANES)

    xf, yf, zf = flat(x), flat(y), flat(z)

    grid = (pl.cdiv(rows, tile_rows),)
    spec = pl.BlockSpec((tile_rows, _LANES), lambda i: (i, 0))

    # VMEM budget: (3 inputs + 1 output) x 2 pipeline buffers x block bytes,
    # plus headroom. Stays well under the 64 MiB physical VMEM of v7x.
    block_bytes = tile_rows * _LANES * itemsize
    vmem_limit = min(100 << 20, max(16 << 20, 8 * block_bytes + (4 << 20)))

    out_flat = pl.pallas_call(
        _masmm_kernel,
        out_shape=jax.ShapeDtypeStruct((rows, _LANES), dtype),
        grid_spec=pltpu.PrefetchScalarGridSpec(
            num_scalar_prefetch=0,
            grid=grid,
            in_specs=[spec, spec, spec],
            out_specs=spec,
        ),
        compiler_params=pltpu.CompilerParams(
            dimension_semantics=("parallel",),
            vmem_limit_bytes=vmem_limit,
        ),
    )(xf, yf, zf)

    if needs_pad:
        return out_flat.reshape(-1)[:n].reshape(orig_shape)
    return out_flat.reshape(orig_shape)


if __name__ == "__main__":
    key = jax.random.PRNGKey(0)

    def make_inputs(shape, dtype=jnp.float32):
        kx, ky, kz = jax.random.split(jax.random.fold_in(key, hash(shape) & 0xFFFF), 3)
        return (
            jax.random.normal(kx, shape, dtype=dtype),
            jax.random.normal(ky, shape, dtype=dtype),
            jax.random.normal(kz, shape, dtype=dtype),
        )

    # 1) Small NCHW shape from the module's intended use; force the Pallas
    #    path so the kernel itself is exercised (lane-aligned, single block).
    shape_small = (2, 4, 16, 16)
    x, y, z = make_inputs(shape_small)
    out = jax.block_until_ready(masmm(x, y, z, force_pallas=True))
    ref = (x + y) - (y * z)
    assert out.shape == shape_small and out.dtype == x.dtype
    assert jnp.allclose(out, ref, atol=1e-6, rtol=1e-6)

    # 2) Larger lane-aligned shape exercising the no-pad fast path and a
    #    multi-block parallel grid (rows=8192, tile_rows=2048 -> grid of 4).
    shape_big = (8, 8, 128, 128)
    x, y, z = make_inputs(shape_big)
    out = jax.block_until_ready(masmm(x, y, z))
    ref = (x + y) - (y * z)
    assert out.shape == shape_big and out.dtype == x.dtype
    assert jnp.allclose(out, ref, atol=1e-6, rtol=1e-6)

    # 3) Ragged shape (numel not a multiple of 128) exercising the padded
    #    tail path, forced through the kernel.
    shape_ragged = (3, 5, 7, 11)
    x, y, z = make_inputs(shape_ragged)
    out = jax.block_until_ready(masmm(x, y, z, force_pallas=True))
    ref = (x + y) - (y * z)
    assert out.shape == shape_ragged and out.dtype == x.dtype
    assert jnp.allclose(out, ref, atol=1e-6, rtol=1e-6)

    print("KERNEL_OK")
</pallas_src>

<mosaic_0001>
module attributes {stable_mosaic.version = 11 : i64} {
  func.func @_masmm_kernel(%arg0: i32, %arg1: memref<16x128xf32, #tpu.memory_space<vmem>>, %arg2: memref<16x128xf32, #tpu.memory_space<vmem>>, %arg3: memref<16x128xf32, #tpu.memory_space<vmem>>, %arg4: memref<16x128xf32, #tpu.memory_space<vmem>>) attributes {dimension_semantics = [#tpu.dimension_semantics<parallel>], iteration_bounds = array<i64: 1>, scalar_prefetch = 0 : i64, scratch_operands = 0 : i64, tpu.core_type = #tpu.core_type<tc>, window_params = [{transform_indices = @transform_0, window_bounds = array<i64: 16, 128>}, {transform_indices = @transform_1, window_bounds = array<i64: 16, 128>}, {transform_indices = @transform_2, window_bounds = array<i64: 16, 128>}, {transform_indices = @transform_3, window_bounds = array<i64: 16, 128>}]} {
    %c0 = arith.constant 0 : index
    %c0_0 = arith.constant 0 : index
    %0 = vector.load %arg1[%c0, %c0_0] : memref<16x128xf32, #tpu.memory_space<vmem>>, vector<16x128xf32>
    %c0_1 = arith.constant 0 : index
    %c0_2 = arith.constant 0 : index
    %1 = vector.load %arg2[%c0_1, %c0_2] : memref<16x128xf32, #tpu.memory_space<vmem>>, vector<16x128xf32>
    %c0_3 = arith.constant 0 : index
    %c0_4 = arith.constant 0 : index
    %2 = vector.load %arg3[%c0_3, %c0_4] : memref<16x128xf32, #tpu.memory_space<vmem>>, vector<16x128xf32>
    %3 = arith.addf %0, %1 : vector<16x128xf32>
    %4 = arith.mulf %1, %2 : vector<16x128xf32>
    %5 = arith.subf %3, %4 : vector<16x128xf32>
    %c0_5 = arith.constant 0 : index
    %c0_6 = arith.constant 0 : index
    %6 = vector.load %arg4[%c0_5, %c0_6] : memref<16x128xf32, #tpu.memory_space<vmem>>, vector<16x128xf32>
    tpu.vector_store %arg4[%c0_5, %c0_6], %5 {strides = array<i32>} : memref<16x128xf32, #tpu.memory_space<vmem>>, vector<16x128xf32>,
    return
  }
  func.func @transform_0(%arg0: i32) -> (i32, i32) {
    %c0_i32 = arith.constant 0 : i32
    %c0_i32_0 = arith.constant 0 : i32
    return %arg0, %c0_i32 : i32, i32
  }
  func.func @transform_1(%arg0: i32) -> (i32, i32) {
    %c0_i32 = arith.constant 0 : i32
    %c0_i32_0 = arith.constant 0 : i32
    return %arg0, %c0_i32 : i32, i32
  }
  func.func @transform_2(%arg0: i32) -> (i32, i32) {
    %c0_i32 = arith.constant 0 : i32
    %c0_i32_0 = arith.constant 0 : i32
    return %arg0, %c0_i32 : i32, i32
  }
  func.func @transform_3(%arg0: i32) -> (i32, i32) {
    %c0_i32 = arith.constant 0 : i32
    %c0_i32_0 = arith.constant 0 : i32
    return %arg0, %c0_i32 : i32, i32
  }
}

</mosaic_0001>

<llo_original>
// kernel: tpu_custom_call.1
$region0: #{tpu_custom_call.1}
  #allocation0 [shape = 'u32[]', space=smem, size = 0x4, offset = 0x4, fixed_abs, tag = 'smem constant byte address 0x4 - core index']
  #allocation1 [shape = 'u32[144,128]{1,0:T(1,128)}', space=vmem, size = 0x12000, scoped, tag = 'internal scratch']
  %s0 = inlined_call_operand.hbm [shape: f32[16,128], index: 0, kind: input, shape index: {}]
  %s1 = inlined_call_operand.hbm [shape: f32[16,128], index: 1, kind: input, shape index: {}]
  %s2 = inlined_call_operand.hbm [shape: f32[16,128], index: 2, kind: input, shape index: {}]
  %s3 = inlined_call_operand.hbm [shape: f32[16,128], index: 3, kind: output, shape index: {}]
  %s4 = sld [smem:[#allocation0]]
  $region34: #{tpu_custom_call.1} parent=0
    _
  %s6 = ssub.s32 1, %s4
  %s7 = scalar_select 0, %s6, %s4
  $region1: #{tpu_custom_call.1} parent=0
    #allocation2 [shape = 'u8[8192]{0}', space=vmem, size = 0x2000, scoped, tag = 'input window, operand 0, single buffered']
    #allocation3 [shape = 's32[1]{0}', space=sflag, size = 0x4, scoped, tag = 'scoped memory for tpu_custom_call.1']
    #allocation4 [shape = 's32[1]{0}', space=sflag, size = 0x4, scoped, tag = 'scoped memory for tpu_custom_call.1']
    #allocation5 [shape = 'u8[8192]{0}', space=vmem, size = 0x2000, scoped, tag = 'input window, operand 1, single buffered']
    #allocation6 [shape = 's32[1]{0}', space=sflag, size = 0x4, scoped, tag = 'scoped memory for tpu_custom_call.1']
    #allocation7 [shape = 'u8[8192]{0}', space=vmem, size = 0x2000, scoped, tag = 'input window, operand 2, single buffered']
    #allocation8 [shape = 'u8[8192]{0}', space=vmem, size = 0x2000, scoped, tag = 'output window, operand 0, single buffered']
    %8 = vsyncpa [#allocation3], 0
    %9 = vsyncpa [#allocation6], 0
    %10 = vsyncpa [#allocation4], 0
    // Predicated region
    $region2: #{tpu_custom_call.1} parent=1 // pred_check
      _
    $region3: #{tpu_custom_call.1} parent=1 // pred_check_branch
      %12 = sbr.rel (0) target = $region5
    $region4: #{tpu_custom_call.1} parent=1 // pred_region
      %s14 = ssub.s32 256, 256
      %15 = vsyncadd [#allocation3], %s14
      %s16 = sshll.u32 [#allocation2], 4
      %s17 = int_to_ptr.vmem [resolvable:$true] %s16
      %22 = dma.hbm_to_vmem [thread:$0]  %s0, 256, %s17, [#allocation3], 128, 128, 8
    $region5: #{tpu_custom_call.1} parent=1 // pred_fallthru
      _
    // Predicated region
    $region6: #{tpu_custom_call.1} parent=1 // pred_check
      _
    $region7: #{tpu_custom_call.1} parent=1 // pred_check_branch
      %24 = sbr.rel (0) target = $region9
    $region8: #{tpu_custom_call.1} parent=1 // pred_region
      %s26 = ssub.s32 256, 256
      %27 = vsyncadd [#allocation6], %s26
      %s28 = sshll.u32 [#allocation5], 4
      %s29 = int_to_ptr.vmem [resolvable:$true] %s28
      %34 = dma.hbm_to_vmem [thread:$0]  %s1, 256, %s29, [#allocation6], 128, 128, 8
    $region9: #{tpu_custom_call.1} parent=1 // pred_fallthru
      _
    // Predicated region
    $region10: #{tpu_custom_call.1} parent=1 // pred_check
      _
    $region11: #{tpu_custom_call.1} parent=1 // pred_check_branch
      %36 = sbr.rel (0) target = $region13
    $region12: #{tpu_custom_call.1} parent=1 // pred_region
      %s38 = ssub.s32 256, 256
      %39 = vsyncadd [#allocation6], %s38
      %s40 = sshll.u32 [#allocation7], 4
      %s41 = int_to_ptr.vmem [resolvable:$true] %s40
      %46 = dma.hbm_to_vmem [thread:$0]  %s2, 256, %s41, [#allocation6], 128, 128, 8
    $region13: #{tpu_custom_call.1} parent=1 // pred_fallthru
      _
    // Predicated region
    $region14: #{tpu_custom_call.1} parent=1 // pred_check
      _
    $region15: #{tpu_custom_call.1} parent=1 // pred_check_branch
      %48 = sbr.rel (0) target = $region17
    $region16: #{tpu_custom_call.1} parent=1 // pred_region
      %49 = dma.done [#allocation3], 256
    $region17: #{tpu_custom_call.1} parent=1 // pred_fallthru
      _
    // Predicated region
    $region18: #{tpu_custom_call.1} parent=1 // pred_check
      _
    $region19: #{tpu_custom_call.1} parent=1 // pred_check_branch
      %51 = sbr.rel (0) target = $region21
    $region20: #{tpu_custom_call.1} parent=1 // pred_region
      %52 = dma.done [#allocation6], 256
    $region21: #{tpu_custom_call.1} parent=1 // pred_fallthru
      _
    // Predicated region
    $region22: #{tpu_custom_call.1} parent=1 // pred_check
      _
    $region23: #{tpu_custom_call.1} parent=1 // pred_check_branch
      %54 = sbr.rel (0) target = $region25
    $region24: #{tpu_custom_call.1} parent=1 // pred_region
      %55 = dma.done [#allocation6], 256
    $region25: #{tpu_custom_call.1} parent=1 // pred_fallthru
      _
    %v56 = vld [vmem:[#allocation2] sm:$0xff]
    %v57 = vld [vmem:[#allocation2 + $0x8] sm:$0xff]
    %v58 = vld [vmem:[#allocation5] sm:$0xff]
    %v59 = vld [vmem:[#allocation5 + $0x8] sm:$0xff]
    %v60 = vld [vmem:[#allocation7] sm:$0xff]
    %v61 = vld [vmem:[#allocation7 + $0x8] sm:$0xff]
    %v62 = vadd.f32 %v56, %v58
    %v63 = vadd.f32 %v57, %v59
    %v64 = vmul.f32 %v58, %v60
    %v65 = vmul.f32 %v59, %v61
    %v66 = vsub.f32 %v62, %v64
    %v67 = vsub.f32 %v63, %v65
    %68 = vst [vmem:[#allocation8] sm:$0xff] %v66
    %69 = vst [vmem:[#allocation8 + $0x8] sm:$0xff] %v67
    // Predicated region
    $region26: #{tpu_custom_call.1} parent=1 // pred_check
      _
    $region27: #{tpu_custom_call.1} parent=1 // pred_check_branch
      %71 = sbr.rel (0) target = $region29
    $region28: #{tpu_custom_call.1} parent=1 // pred_region
      %s73 = ssub.s32 256, 256
      %74 = vsyncadd [#allocation4], %s73
      %s75 = sshll.u32 [#allocation8], 4
      %s76 = int_to_ptr.vmem [resolvable:$true] %s75
      %81 = dma.vmem_to_hbm [thread:$0]  %s76, 256, %s3, [#allocation4], 128, 128, 8
    $region29: #{tpu_custom_call.1} parent=1 // pred_fallthru
      _
    // Predicated region
    $region30: #{tpu_custom_call.1} parent=1 // pred_check
      _
    $region31: #{tpu_custom_call.1} parent=1 // pred_check_branch
      %83 = sbr.rel (0) target = $region33
    $region32: #{tpu_custom_call.1} parent=1 // pred_region
      %84 = dma.done [#allocation4], 256
    $region33: #{tpu_custom_call.1} parent=1 // pred_fallthru
      _
    %85 = vsyncpa [#allocation3], 1
    %86 = vsyncpa [#allocation6], 1
    %87 = vsyncpa [#allocation4], 1

</llo_original>
